<compile_context>
chip_gen: v7x
topology: tpu7x:2x2x1
jax: 0.10.0
libtpu: 0.0.40
codegen_flags: <defaults>
</compile_context>

<pallas_src>
import functools

import jax
import jax.numpy as jnp
from jax.experimental import pallas as pl
from jax.experimental.pallas import tpu as pltpu


def _round_up(n, m):
    return ((n + m - 1) // m) * m


def _fused_mlp_kernel(*refs, n_layers):
    """refs = (x_ref, w0_ref, b0_ref, ..., w{L-1}_ref, b{L-1}_ref, o_ref).

    Computes h = relu(h @ W_i + b_i) for i < L-1 and y = h @ W_last + b_last entirely in
    VMEM/vregs. Weights are bf16, accumulation is f32 on the MXU. Last layer has no ReLU.
    """
    x_ref = refs[0]
    o_ref = refs[-1]
    wb_refs = refs[1:-1]

    h = x_ref[...]
    for i in range(n_layers):
        w_ref = wb_refs[2 * i]
        b_ref = wb_refs[2 * i + 1]
        # bf16 x bf16 -> f32 accumulate (single-pass MXU); bias add + ReLU ride the VPU slack.
        h = jnp.dot(h.astype(w_ref.dtype), w_ref[...],
                    preferred_element_type=jnp.float32) + b_ref[...]
        if i < n_layers - 1:
            h = jnp.maximum(h, 0.0)
    o_ref[...] = h.astype(o_ref.dtype)


def init_mlp_params(key, input_size, hidden_sizes, output_size):
    """Deterministic init mirroring nn.Linear default (uniform(-1/sqrt(fan_in), +1/sqrt(fan_in))).

    Returns PyTorch-layout params: list of (w [out, in], b [out]) in f32.
    """
    layer_sizes = [input_size] + list(hidden_sizes) + [output_size]
    params = []
    for i in range(len(layer_sizes) - 1):
        fan_in, fan_out = layer_sizes[i], layer_sizes[i + 1]
        key, wk, bk = jax.random.split(key, 3)
        bound = 1.0 / (fan_in ** 0.5)
        w = jax.random.uniform(wk, (fan_out, fan_in), jnp.float32, -bound, bound)
        b = jax.random.uniform(bk, (fan_out,), jnp.float32, -bound, bound)
        params.append((w, b))
    return params


def prepare_params(params, lane_pad=128):
    """One-time prep: transpose to [in, out], cast weights to bf16, zero-pad N dims to lane_pad.

    Layer 0 keeps K = input_size (no x padding needed in the hot path); layers i>0 pad K to match
    the previous layer's padded N, so the padded columns (exactly zero after bias+ReLU) multiply
    zero weight rows and numerics are unchanged.
    lane_pad: 128 everywhere is correct; 256 better fills the v6e/v7x MXU once widths scale.
    """
    prepared = []
    for i, (w, b) in enumerate(params):
        out_f, in_f = w.shape
        k_pad = in_f if i == 0 else _round_up(in_f, lane_pad)
        n_pad = _round_up(out_f, lane_pad)
        w_t = (jnp.zeros((k_pad, n_pad), jnp.bfloat16)
               .at[:in_f, :out_f].set(w.T.astype(jnp.bfloat16)))
        b_p = jnp.zeros((1, n_pad), jnp.float32).at[:, :out_f].set(b)
        prepared.append((w_t, b_p))
    return prepared


@functools.partial(jax.jit, static_argnames=("output_size",))
def mlp_forward(prepared_params, x, output_size):
    """Fused single-kernel forward. x: [B, input_size] f32 (unpadded). Returns [B, output_size]."""
    B, in_f = x.shape
    n_layers = len(prepared_params)
    n_pad_out = prepared_params[-1][0].shape[1]

    # Batch tiling: one tile for small B (no wrapper-side padding op in the common case),
    # 256-row tiles for large B so megacore can shard rows across both v7x TensorCores.
    b_tile = B if B <= 256 else 256
    b_pad = pl.cdiv(B, b_tile) * b_tile
    if b_pad != B:
        x = jnp.zeros((b_pad, in_f), x.dtype).at[:B, :].set(x)
    grid = (b_pad // b_tile,)

    flat_args = [x]
    in_specs = [pl.BlockSpec((b_tile, in_f), lambda i: (i, 0))]
    flops = 0
    bytes_accessed = b_pad * in_f * 4 + b_pad * n_pad_out * 4
    vmem_needed = 2 * (b_tile * in_f * 4 + b_tile * n_pad_out * 4)
    for w_t, b_p in prepared_params:
        flat_args.append(w_t)
        in_specs.append(pl.BlockSpec(w_t.shape, lambda i: (0, 0)))  # VMEM-resident across grid
        flat_args.append(b_p)
        in_specs.append(pl.BlockSpec(b_p.shape, lambda i: (0, 0)))
        w_bytes = w_t.size * w_t.dtype.itemsize
        b_bytes = b_p.size * b_p.dtype.itemsize
        flops += 2 * b_pad * w_t.shape[0] * w_t.shape[1]
        bytes_accessed += w_bytes + b_bytes
        vmem_needed += 2 * (w_bytes + b_bytes)  # BlockSpec inputs are double-buffered

    # Explicit VMEM budget (guards v5e's 16 MiB scoped default and v7x's 64 MiB physical).
    vmem_limit = int(min(max(2 * vmem_needed, 32 << 20), 64 << 20))

    out_pad = pl.pallas_call(
        functools.partial(_fused_mlp_kernel, n_layers=n_layers),
        out_shape=jax.ShapeDtypeStruct((b_pad, n_pad_out), x.dtype),
        grid=grid,
        in_specs=in_specs,
        out_specs=pl.BlockSpec((b_tile, n_pad_out), lambda i: (i, 0)),
        compiler_params=pltpu.CompilerParams(
            dimension_semantics=("parallel",),
            vmem_limit_bytes=vmem_limit,
        ),
        cost_estimate=pl.CostEstimate(
            flops=flops, transcendentals=0, bytes_accessed=bytes_accessed),
    )(*flat_args)

    # Slice back to the logical output width (consumers that tolerate a padded lane-dense
    # [B, n_pad_out] slab can take out_pad directly and skip this copy).
    return out_pad[:B, :output_size]


if __name__ == "__main__":
    # Small shapes consistent with the module's forward: x is [batch, input_size].
    batch = 8
    input_size = 32
    hidden_sizes = [64, 48]
    output_size = 16

    key = jax.random.PRNGKey(0)
    key, xk = jax.random.split(key)
    x = jax.random.normal(xk, (batch, input_size), jnp.float32)

    params = init_mlp_params(key, input_size, hidden_sizes, output_size)
    prepared = prepare_params(params)  # transpose + bf16 cast + pad once, outside the hot path

    out = mlp_forward(prepared, x, output_size)
    out = jax.block_until_ready(out)

    # Reference check in plain JAX f32 (eval-mode dropout = identity), unpadded math.
    # Tolerance relaxed vs the pure-f32 version because weights/activation feed are bf16
    # (accumulation stays f32).
    ref = x
    for i, (w, b) in enumerate(params):
        ref = ref @ w.T + b
        if i < len(params) - 1:
            ref = jnp.maximum(ref, 0.0)

    assert out.shape == (batch, output_size)
    max_err = float(jnp.max(jnp.abs(out - ref)))
    assert jnp.allclose(out, ref, atol=5e-2, rtol=5e-2), f"mismatch vs reference, max_err={max_err}"

    print("KERNEL_OK")
</pallas_src>

<mosaic_0001>
module attributes {stable_mosaic.version = 11 : i64} {
  func.func @_fused_mlp_kernel(%arg0: i32, %arg1: memref<8x32xf32, #tpu.memory_space<vmem>>, %arg2: memref<32x128xbf16, #tpu.memory_space<vmem>>, %arg3: memref<1x128xf32, #tpu.memory_space<vmem>>, %arg4: memref<128x128xbf16, #tpu.memory_space<vmem>>, %arg5: memref<1x128xf32, #tpu.memory_space<vmem>>, %arg6: memref<128x128xbf16, #tpu.memory_space<vmem>>, %arg7: memref<1x128xf32, #tpu.memory_space<vmem>>, %arg8: memref<8x128xf32, #tpu.memory_space<vmem>>) attributes {dimension_semantics = [#tpu.dimension_semantics<parallel>], iteration_bounds = array<i64: 1>, scalar_prefetch = 0 : i64, scratch_operands = 0 : i64, tpu.core_type = #tpu.core_type<tc>, window_params = [{transform_indices = @transform_0, window_bounds = array<i64: 8, 32>}, {pipeline_mode = #tpu.pipeline_mode<synchronous>, transform_indices = @transform_1, window_bounds = array<i64: 32, 128>}, {pipeline_mode = #tpu.pipeline_mode<synchronous>, transform_indices = @transform_2, window_bounds = array<i64: 1, 128>}, {pipeline_mode = #tpu.pipeline_mode<synchronous>, transform_indices = @transform_3, window_bounds = array<i64: 128, 128>}, {pipeline_mode = #tpu.pipeline_mode<synchronous>, transform_indices = @transform_4, window_bounds = array<i64: 1, 128>}, {pipeline_mode = #tpu.pipeline_mode<synchronous>, transform_indices = @transform_5, window_bounds = array<i64: 128, 128>}, {pipeline_mode = #tpu.pipeline_mode<synchronous>, transform_indices = @transform_6, window_bounds = array<i64: 1, 128>}, {transform_indices = @transform_7, window_bounds = array<i64: 8, 128>}]} {
    %c0 = arith.constant 0 : index
    %c0_0 = arith.constant 0 : index
    %0 = vector.load %arg1[%c0, %c0_0] : memref<8x32xf32, #tpu.memory_space<vmem>>, vector<8x32xf32>
    %1 = arith.truncf %0 : vector<8x32xf32> to vector<8x32xbf16>
    %c0_1 = arith.constant 0 : index
    %c0_2 = arith.constant 0 : index
    %2 = vector.load %arg2[%c0_1, %c0_2] : memref<32x128xbf16, #tpu.memory_space<vmem>>, vector<32x128xbf16>
    %cst = arith.constant dense<0.000000e+00> : vector<8x128xf32>
    %3 = tpu.matmul %1, %2, %cst {dimension_numbers = #tpu.dot_dimension_numbers<[1], [0], [0], [1], [0, 0, 1, 1], [], []>} : vector<8x32xbf16>, vector<32x128xbf16>, vector<8x128xf32> -> vector<8x128xf32>
    %c0_3 = arith.constant 0 : index
    %c0_4 = arith.constant 0 : index
    %4 = vector.load %arg3[%c0_3, %c0_4] : memref<1x128xf32, #tpu.memory_space<vmem>>, vector<1x128xf32>
    %5 = vector.broadcast %4 : vector<1x128xf32> to vector<8x128xf32>
    %6 = arith.addf %3, %5 : vector<8x128xf32>
    %cst_5 = arith.constant 0.000000e+00 : f32
    %7 = vector.broadcast %cst_5 : f32 to vector<8x128xf32>
    %8 = arith.maximumf %6, %7 : vector<8x128xf32>
    %9 = arith.truncf %8 : vector<8x128xf32> to vector<8x128xbf16>
    %c0_6 = arith.constant 0 : index
    %c0_7 = arith.constant 0 : index
    %10 = vector.load %arg4[%c0_6, %c0_7] : memref<128x128xbf16, #tpu.memory_space<vmem>>, vector<128x128xbf16>
    %cst_8 = arith.constant dense<0.000000e+00> : vector<8x128xf32>
    %11 = tpu.matmul %9, %10, %cst_8 {dimension_numbers = #tpu.dot_dimension_numbers<[1], [0], [0], [1], [0, 0, 1, 1], [], []>} : vector<8x128xbf16>, vector<128x128xbf16>, vector<8x128xf32> -> vector<8x128xf32>
    %c0_9 = arith.constant 0 : index
    %c0_10 = arith.constant 0 : index
    %12 = vector.load %arg5[%c0_9, %c0_10] : memref<1x128xf32, #tpu.memory_space<vmem>>, vector<1x128xf32>
    %13 = vector.broadcast %12 : vector<1x128xf32> to vector<8x128xf32>
    %14 = arith.addf %11, %13 : vector<8x128xf32>
    %cst_11 = arith.constant 0.000000e+00 : f32
    %15 = vector.broadcast %cst_11 : f32 to vector<8x128xf32>
    %16 = arith.maximumf %14, %15 : vector<8x128xf32>
    %17 = arith.truncf %16 : vector<8x128xf32> to vector<8x128xbf16>
    %c0_12 = arith.constant 0 : index
    %c0_13 = arith.constant 0 : index
    %18 = vector.load %arg6[%c0_12, %c0_13] : memref<128x128xbf16, #tpu.memory_space<vmem>>, vector<128x128xbf16>
    %cst_14 = arith.constant dense<0.000000e+00> : vector<8x128xf32>
    %19 = tpu.matmul %17, %18, %cst_14 {dimension_numbers = #tpu.dot_dimension_numbers<[1], [0], [0], [1], [0, 0, 1, 1], [], []>} : vector<8x128xbf16>, vector<128x128xbf16>, vector<8x128xf32> -> vector<8x128xf32>
    %c0_15 = arith.constant 0 : index
    %c0_16 = arith.constant 0 : index
    %20 = vector.load %arg7[%c0_15, %c0_16] : memref<1x128xf32, #tpu.memory_space<vmem>>, vector<1x128xf32>
    %21 = vector.broadcast %20 : vector<1x128xf32> to vector<8x128xf32>
    %22 = arith.addf %19, %21 : vector<8x128xf32>
    %c0_17 = arith.constant 0 : index
    %c0_18 = arith.constant 0 : index
    %23 = vector.load %arg8[%c0_17, %c0_18] : memref<8x128xf32, #tpu.memory_space<vmem>>, vector<8x128xf32>
    tpu.vector_store %arg8[%c0_17, %c0_18], %22 {strides = array<i32>} : memref<8x128xf32, #tpu.memory_space<vmem>>, vector<8x128xf32>,
    return
  }
  func.func @transform_0(%arg0: i32) -> (i32, i32) {
    %c0_i32 = arith.constant 0 : i32
    %c0_i32_0 = arith.constant 0 : i32
    return %arg0, %c0_i32 : i32, i32
  }
  func.func @transform_1(%arg0: i32) -> (i32, i32) {
    %c0_i32 = arith.constant 0 : i32
    %c0_i32_0 = arith.constant 0 : i32
    %c0_i32_1 = arith.constant 0 : i32
    return %c0_i32, %c0_i32_0 : i32, i32
  }
  func.func @transform_2(%arg0: i32) -> (i32, i32) {
    %c0_i32 = arith.constant 0 : i32
    %c0_i32_0 = arith.constant 0 : i32
    %c0_i32_1 = arith.constant 0 : i32
    return %c0_i32, %c0_i32_0 : i32, i32
  }
  func.func @transform_3(%arg0: i32) -> (i32, i32) {
    %c0_i32 = arith.constant 0 : i32
    %c0_i32_0 = arith.constant 0 : i32
    %c0_i32_1 = arith.constant 0 : i32
    return %c0_i32, %c0_i32_0 : i32, i32
  }
  func.func @transform_4(%arg0: i32) -> (i32, i32) {
    %c0_i32 = arith.constant 0 : i32
    %c0_i32_0 = arith.constant 0 : i32
    %c0_i32_1 = arith.constant 0 : i32
    return %c0_i32, %c0_i32_0 : i32, i32
  }
  func.func @transform_5(%arg0: i32) -> (i32, i32) {
    %c0_i32 = arith.constant 0 : i32
    %c0_i32_0 = arith.constant 0 : i32
    %c0_i32_1 = arith.constant 0 : i32
    return %c0_i32, %c0_i32_0 : i32, i32
  }
  func.func @transform_6(%arg0: i32) -> (i32, i32) {
    %c0_i32 = arith.constant 0 : i32
    %c0_i32_0 = arith.constant 0 : i32
    %c0_i32_1 = arith.constant 0 : i32
    return %c0_i32, %c0_i32_0 : i32, i32
  }
  func.func @transform_7(%arg0: i32) -> (i32, i32) {
    %c0_i32 = arith.constant 0 : i32
    %c0_i32_0 = arith.constant 0 : i32
    return %arg0, %c0_i32 : i32, i32
  }
}

</mosaic_0001>

<llo_original>
// kernel: mlp_forward.1
$region0: #{mlp_forward.1}
  #allocation0 [shape = 'u32[]', space=smem, size = 0x4, offset = 0x4, fixed_abs, tag = 'smem constant byte address 0x4 - core index']
  #allocation1 [shape = 'u32[144,128]{1,0:T(1,128)}', space=vmem, size = 0x12000, scoped, tag = 'internal scratch']
  %s0 = inlined_call_operand.vmem [shape: f32[8,32], index: 0, kind: input, shape index: {}]
  %s1 = inlined_call_operand.hbm [shape: bf16[32,128], index: 1, kind: input, shape index: {}]
  %s2 = inlined_call_operand.vmem [shape: f32[1,128], index: 2, kind: input, shape index: {}]
  %s3 = inlined_call_operand.hbm [shape: bf16[128,128], index: 3, kind: input, shape index: {}]
  %s4 = inlined_call_operand.vmem [shape: f32[1,128], index: 4, kind: input, shape index: {}]
  %s5 = inlined_call_operand.hbm [shape: bf16[128,128], index: 5, kind: input, shape index: {}]
  %s6 = inlined_call_operand.vmem [shape: f32[1,128], index: 6, kind: input, shape index: {}]
  %s7 = inlined_call_operand.hbm [shape: f32[8,128], index: 7, kind: output, shape index: {}]
  %s8 = sld [smem:[#allocation0]]
  $region50: #{mlp_forward.1} parent=0
    _
  %s10 = ssub.s32 1, %s8
  %s11 = scalar_select 0, %s10, %s8
  $region1: #{mlp_forward.1} parent=0
    #allocation2 [shape = 'u8[8192]{0}', space=vmem, size = 0x2000, scoped, tag = 'input window, operand 1, single buffered']
    #allocation3 [shape = 's32[1]{0}', space=sflag, size = 0x4, scoped, tag = 'scoped memory for mlp_forward.1']
    #allocation4 [shape = 's32[1]{0}', space=sflag, size = 0x4, scoped, tag = 'scoped memory for mlp_forward.1']
    #allocation5 [shape = 'u8[32768]{0}', space=vmem, size = 0x8000, scoped, tag = 'input window, operand 3, single buffered']
    #allocation6 [shape = 's32[1]{0}', space=sflag, size = 0x4, scoped, tag = 'scoped memory for mlp_forward.1']
    #allocation7 [shape = 'u8[32768]{0}', space=vmem, size = 0x8000, scoped, tag = 'input window, operand 5, single buffered']
    #allocation8 [shape = 'u8[4096]{0}', space=vmem, size = 0x1000, scoped, tag = 'output window, operand 0, single buffered']
    %12 = vsyncpa [#allocation3], 0
    %13 = vsyncpa [#allocation6], 0
    %14 = vsyncpa [#allocation4], 0
    // Predicated region
    $region2: #{mlp_forward.1} parent=1 // pred_check
      _
    $region3: #{mlp_forward.1} parent=1 // pred_check_branch
      %16 = sbr.rel (0) target = $region5
    $region4: #{mlp_forward.1} parent=1 // pred_region
      _
    $region5: #{mlp_forward.1} parent=1 // pred_fallthru
      _
    // Predicated region
    $region6: #{mlp_forward.1} parent=1 // pred_check
      _
    $region7: #{mlp_forward.1} parent=1 // pred_check_branch
      %18 = sbr.rel (0) target = $region9
    $region8: #{mlp_forward.1} parent=1 // pred_region
      %s20 = ssub.s32 256, 256
      %21 = vsyncadd [#allocation3], %s20
      %s22 = sshll.u32 [#allocation2], 4
      %s23 = int_to_ptr.vmem [resolvable:$true] %s22
      %28 = dma.hbm_to_vmem [thread:$0]  %s1, 256, %s23, [#allocation3], 64, 64, 4
    $region9: #{mlp_forward.1} parent=1 // pred_fallthru
      _
    // Predicated region
    $region10: #{mlp_forward.1} parent=1 // pred_check
      _
    $region11: #{mlp_forward.1} parent=1 // pred_check_branch
      %30 = sbr.rel (0) target = $region13
    $region12: #{mlp_forward.1} parent=1 // pred_region
      _
    $region13: #{mlp_forward.1} parent=1 // pred_fallthru
      _
    // Predicated region
    $region14: #{mlp_forward.1} parent=1 // pred_check
      _
    $region15: #{mlp_forward.1} parent=1 // pred_check_branch
      %32 = sbr.rel (0) target = $region17
    $region16: #{mlp_forward.1} parent=1 // pred_region
      %s34 = ssub.s32 1024, 1024
      %35 = vsyncadd [#allocation6], %s34
      %s36 = sshll.u32 [#allocation5], 4
      %s37 = int_to_ptr.vmem [resolvable:$true] %s36
      %42 = dma.hbm_to_vmem [thread:$0]  %s3, 1024, %s37, [#allocation6], 64, 64, 4
    $region17: #{mlp_forward.1} parent=1 // pred_fallthru
      _
    // Predicated region
    $region18: #{mlp_forward.1} parent=1 // pred_check
      _
    $region19: #{mlp_forward.1} parent=1 // pred_check_branch
      %44 = sbr.rel (0) target = $region21
    $region20: #{mlp_forward.1} parent=1 // pred_region
      _
    $region21: #{mlp_forward.1} parent=1 // pred_fallthru
      _
    // Predicated region
    $region22: #{mlp_forward.1} parent=1 // pred_check
      _
    $region23: #{mlp_forward.1} parent=1 // pred_check_branch
      %46 = sbr.rel (0) target = $region25
    $region24: #{mlp_forward.1} parent=1 // pred_region
      %s48 = ssub.s32 1024, 1024
      %49 = vsyncadd [#allocation6], %s48
      %s50 = sshll.u32 [#allocation7], 4
      %s51 = int_to_ptr.vmem [resolvable:$true] %s50
      %56 = dma.hbm_to_vmem [thread:$0]  %s5, 1024, %s51, [#allocation6], 64, 64, 4
    $region25: #{mlp_forward.1} parent=1 // pred_fallthru
      _
    // Predicated region
    $region26: #{mlp_forward.1} parent=1 // pred_check
      _
    $region27: #{mlp_forward.1} parent=1 // pred_check_branch
      %58 = sbr.rel (0) target = $region29
    $region28: #{mlp_forward.1} parent=1 // pred_region
      _
    $region29: #{mlp_forward.1} parent=1 // pred_fallthru
      _
    // Predicated region
    $region30: #{mlp_forward.1} parent=1 // pred_check
      _
    $region31: #{mlp_forward.1} parent=1 // pred_check_branch
      %60 = sbr.rel (0) target = $region33
    $region32: #{mlp_forward.1} parent=1 // pred_region
      %61 = dma.done [#allocation3], 256
    $region33: #{mlp_forward.1} parent=1 // pred_fallthru
      _
    // Predicated region
    $region34: #{mlp_forward.1} parent=1 // pred_check
      _
    $region35: #{mlp_forward.1} parent=1 // pred_check_branch
      %63 = sbr.rel (0) target = $region37
    $region36: #{mlp_forward.1} parent=1 // pred_region
      %64 = dma.done [#allocation6], 1024
    $region37: #{mlp_forward.1} parent=1 // pred_fallthru
      _
    // Predicated region
    $region38: #{mlp_forward.1} parent=1 // pred_check
      _
    $region39: #{mlp_forward.1} parent=1 // pred_check_branch
      %66 = sbr.rel (0) target = $region41
    $region40: #{mlp_forward.1} parent=1 // pred_region
      %67 = dma.done [#allocation6], 1024
    $region41: #{mlp_forward.1} parent=1 // pred_fallthru
      _
    %v69 = vld [vmem:[%s0] sm:$0xff]
    %v70 = vpack.c.bf16 %v69, %v69
    %v71 = vld [vmem:[#allocation2] sm:$0xf]
    %v72 = vld [vmem:[#allocation2 + $0x4] sm:$0xf]
    %v73 = vld [vmem:[#allocation2 + $0x8] sm:$0xf]
    %v74 = vld [vmem:[#allocation2 + $0xc] sm:$0xf]
    %v75 = vld [vmem:[%s2] sm:$0x1]
    %v77 = vlaneseq
    %v78 = vshrl.u32 %v77, 7
    %v79 = vsub.s32 0, %v78
    %v80 = vrot.slane %v75, %v79
    %v86 = vunpack.c.l.b16 %v71
    %v87 = vunpack.c.l.b16 %v72
    %v88 = vunpack.c.l.b16 %v73
    %v89 = vunpack.c.l.b16 %v74
    %v90 = vpack.c.b16 %v87, %v86
    %v91 = vpack.c.b16 %v89, %v88
    %vm94 = vcmask 261120
    %v96 = vsel %vm94, %v70, 0
    %98 = vmatprep.subr.bf16.mxu0 0
    %99 = vmatpush1.bf16.msra.mxu0 %v90
    %100 = vmatprep.subr.bf16.mxu0 0
    %101 = vmatpush1.bf16.msra.mxu0 %v91
    %102 = vmatprep.subr.bf16.mxu0 0
    %103 = vmatpush1.bf16.msra.mxu0 0
    %104 = vmatprep.subr.bf16.mxu0 0
    %105 = vmatpush1.bf16.msra.mxu0 0
    %106 = vmatprep.subr.bf16.mxu0 0
    %107 = vmatpush1.bf16.msra.mxu0 0
    %108 = vmatprep.subr.bf16.mxu0 0
    %109 = vmatpush1.bf16.msra.mxu0 0
    %110 = vmatprep.subr.bf16.mxu0 0
    %111 = vmatpush1.bf16.msra.mxu0 0
    %112 = vmatprep.subr.bf16.mxu0 0
    %113 = vmatpush1.bf16.msra.mxu0 0
    %114 = vmatprep.subr.bf16.mxu0 0
    %115 = vmatpush1.bf16.msra.mxu0 0
    %116 = vmatprep.subr.bf16.mxu0 0
    %117 = vmatpush1.bf16.msra.mxu0 0
    %118 = vmatprep.subr.bf16.mxu0 0
    %119 = vmatpush1.bf16.msra.mxu0 0
    %120 = vmatprep.subr.bf16.mxu0 0
    %121 = vmatpush1.bf16.msra.mxu0 0
    %122 = vmatprep.subr.bf16.mxu0 0
    %123 = vmatpush1.bf16.msra.mxu0 0
    %124 = vmatprep.subr.bf16.mxu0 0
    %125 = vmatpush1.bf16.msra.mxu0 0
    %126 = vmatprep.subr.bf16.mxu0 0
    %127 = vmatpush1.bf16.msra.mxu0 0
    %128 = vmatprep.subr.bf16.mxu0 0
    %129 = vmatpush1.bf16.msra.mxu0 0
    %130 = vmatprep.mubr.bf16.mxu0 0
    %131 = vmatmul.mubr.bf16.gmra.mrb[0].mxu0 %v96
    %v132 = vpop.f32.mrb[0].mxu0
    %v133 = vadd.f32 %v80, %v132
    %v134 = vpop.f32.mrb[0].mxu0
    %v135 = vpop.f32.mrb[0].mxu0
    %v136 = vpop.f32.mrb[0].mxu0
    %137 = vdwg.mxu0
    %v138 = vmax.f32 %v133, 0.0
    %v139 = vpack.c.bf16 %v138, %v138
    %v140 = vld [vmem:[#allocation5] sm:$0xf]
    %v141 = vld [vmem:[#allocation5 + $0x4] sm:$0xf]
    %v142 = vld [vmem:[#allocation5 + $0x8] sm:$0xf]
    %v143 = vld [vmem:[#allocation5 + $0xc] sm:$0xf]
    %v144 = vld [vmem:[#allocation5 + $0x10] sm:$0xf]
    %v145 = vld [vmem:[#allocation5 + $0x14] sm:$0xf]
    %v146 = vld [vmem:[#allocation5 + $0x18] sm:$0xf]
    %v147 = vld [vmem:[#allocation5 + $0x1c] sm:$0xf]
    %v148 = vld [vmem:[#allocation5 + $0x20] sm:$0xf]
    %v149 = vld [vmem:[#allocation5 + $0x24] sm:$0xf]
    %v150 = vld [vmem:[#allocation5 + $0x28] sm:$0xf]
    %v151 = vld [vmem:[#allocation5 + $0x2c] sm:$0xf]
    %v152 = vld [vmem:[#allocation5 + $0x30] sm:$0xf]
    %v153 = vld [vmem:[#allocation5 + $0x34] sm:$0xf]
    %v154 = vld [vmem:[#allocation5 + $0x38] sm:$0xf]
    %v155 = vld [vmem:[#allocation5 + $0x3c] sm:$0xf]
    %v156 = vld [vmem:[%s4] sm:$0x1]
    %v158 = vlaneseq
    %v159 = vshrl.u32 %v158, 7
    %v160 = vsub.s32 0, %v159
    %v161 = vrot.slane %v156, %v160
    %v179 = vunpack.c.l.b16 %v140
    %v180 = vunpack.c.l.b16 %v141
    %v181 = vunpack.c.l.b16 %v142
    %v182 = vunpack.c.l.b16 %v143
    %v183 = vunpack.c.l.b16 %v144
    %v184 = vunpack.c.l.b16 %v145
    %v185 = vunpack.c.l.b16 %v146
    %v186 = vunpack.c.l.b16 %v147
    %v187 = vunpack.c.l.b16 %v148
    %v188 = vunpack.c.l.b16 %v149
    %v189 = vunpack.c.l.b16 %v150
    %v190 = vunpack.c.l.b16 %v151
    %v191 = vunpack.c.l.b16 %v152
    %v192 = vunpack.c.l.b16 %v153
    %v193 = vunpack.c.l.b16 %v154
    %v194 = vunpack.c.l.b16 %v155
    %v195 = vpack.c.b16 %v180, %v179
    %v196 = vpack.c.b16 %v182, %v181
    %v197 = vpack.c.b16 %v184, %v183
    %v198 = vpack.c.b16 %v186, %v185
    %v199 = vpack.c.b16 %v188, %v187
    %v200 = vpack.c.b16 %v190, %v189
    %v201 = vpack.c.b16 %v192, %v191
    %v202 = vpack.c.b16 %v194, %v193
    %211 = vmatprep.subr.bf16.mxu0 0
    %212 = vmatpush1.bf16.msra.mxu0 %v195
    %213 = vmatprep.subr.bf16.mxu0 0
    %214 = vmatpush1.bf16.msra.mxu0 %v196
    %215 = vmatprep.subr.bf16.mxu0 0
    %216 = vmatpush1.bf16.msra.mxu0 %v197
    %217 = vmatprep.subr.bf16.mxu0 0
    %218 = vmatpush1.bf16.msra.mxu0 %v198
    %219 = vmatprep.subr.bf16.mxu0 0
    %220 = vmatpush1.bf16.msra.mxu0 %v199
    %221 = vmatprep.subr.bf16.mxu0 0
    %222 = vmatpush1.bf16.msra.mxu0 %v200
    %223 = vmatprep.subr.bf16.mxu0 0
    %224 = vmatpush1.bf16.msra.mxu0 %v201
    %225 = vmatprep.subr.bf16.mxu0 0
    %226 = vmatpush1.bf16.msra.mxu0 %v202
    %227 = vmatprep.subr.bf16.mxu0 0
    %228 = vmatpush1.bf16.msra.mxu0 0
    %229 = vmatprep.subr.bf16.mxu0 0
    %230 = vmatpush1.bf16.msra.mxu0 0
    %231 = vmatprep.subr.bf16.mxu0 0
    %232 = vmatpush1.bf16.msra.mxu0 0
    %233 = vmatprep.subr.bf16.mxu0 0
    %234 = vmatpush1.bf16.msra.mxu0 0
    %235 = vmatprep.subr.bf16.mxu0 0
    %236 = vmatpush1.bf16.msra.mxu0 0
    %237 = vmatprep.subr.bf16.mxu0 0
    %238 = vmatpush1.bf16.msra.mxu0 0
    %239 = vmatprep.subr.bf16.mxu0 0
    %240 = vmatpush1.bf16.msra.mxu0 0
    %241 = vmatprep.subr.bf16.mxu0 0
    %242 = vmatpush1.bf16.msra.mxu0 0
    %243 = vmatprep.mubr.bf16.mxu0 0
    %244 = vmatmul.mubr.bf16.gmra.mrb[0].mxu0 %v139
    %v245 = vpop.f32.mrb[0].mxu0
    %v246 = vadd.f32 %v161, %v245
    %v247 = vpop.f32.mrb[0].mxu0
    %v248 = vpop.f32.mrb[0].mxu0
    %v249 = vpop.f32.mrb[0].mxu0
    %250 = vdwg.mxu0
    %v251 = vmax.f32 %v246, 0.0
    %v252 = vpack.c.bf16 %v251, %v251
    %v253 = vld [vmem:[#allocation7] sm:$0xf]
    %v254 = vld [vmem:[#allocation7 + $0x4] sm:$0xf]
    %v255 = vld [vmem:[#allocation7 + $0x8] sm:$0xf]
    %v256 = vld [vmem:[#allocation7 + $0xc] sm:$0xf]
    %v257 = vld [vmem:[#allocation7 + $0x10] sm:$0xf]
    %v258 = vld [vmem:[#allocation7 + $0x14] sm:$0xf]
    %v259 = vld [vmem:[#allocation7 + $0x18] sm:$0xf]
    %v260 = vld [vmem:[#allocation7 + $0x1c] sm:$0xf]
    %v261 = vld [vmem:[#allocation7 + $0x20] sm:$0xf]
    %v262 = vld [vmem:[#allocation7 + $0x24] sm:$0xf]
    %v263 = vld [vmem:[#allocation7 + $0x28] sm:$0xf]
    %v264 = vld [vmem:[#allocation7 + $0x2c] sm:$0xf]
    %v265 = vld [vmem:[#allocation7 + $0x30] sm:$0xf]
    %v266 = vld [vmem:[#allocation7 + $0x34] sm:$0xf]
    %v267 = vld [vmem:[#allocation7 + $0x38] sm:$0xf]
    %v268 = vld [vmem:[#allocation7 + $0x3c] sm:$0xf]
    %v269 = vld [vmem:[%s6] sm:$0x1]
    %v271 = vlaneseq
    %v272 = vshrl.u32 %v271, 7
    %v273 = vsub.s32 0, %v272
    %v274 = vrot.slane %v269, %v273
    %v292 = vunpack.c.l.b16 %v253
    %v293 = vunpack.c.l.b16 %v254
    %v294 = vunpack.c.l.b16 %v255
    %v295 = vunpack.c.l.b16 %v256
    %v296 = vunpack.c.l.b16 %v257
    %v297 = vunpack.c.l.b16 %v258
    %v298 = vunpack.c.l.b16 %v259
    %v299 = vunpack.c.l.b16 %v260
    %v300 = vunpack.c.l.b16 %v261
    %v301 = vunpack.c.l.b16 %v262
    %v302 = vunpack.c.l.b16 %v263
    %v303 = vunpack.c.l.b16 %v264
    %v304 = vunpack.c.l.b16 %v265
    %v305 = vunpack.c.l.b16 %v266
    %v306 = vunpack.c.l.b16 %v267
    %v307 = vunpack.c.l.b16 %v268
    %v308 = vpack.c.b16 %v293, %v292
    %v309 = vpack.c.b16 %v295, %v294
    %v310 = vpack.c.b16 %v297, %v296
    %v311 = vpack.c.b16 %v299, %v298
    %v312 = vpack.c.b16 %v301, %v300
    %v313 = vpack.c.b16 %v303, %v302
    %v314 = vpack.c.b16 %v305, %v304
    %v315 = vpack.c.b16 %v307, %v306
    %324 = vmatprep.subr.bf16.mxu0 0
    %325 = vmatpush1.bf16.msra.mxu0 %v308
    %326 = vmatprep.subr.bf16.mxu0 0
    %327 = vmatpush1.bf16.msra.mxu0 %v309
    %328 = vmatprep.subr.bf16.mxu0 0
    %329 = vmatpush1.bf16.msra.mxu0 %v310
    %330 = vmatprep.subr.bf16.mxu0 0
    %331 = vmatpush1.bf16.msra.mxu0 %v311
    %332 = vmatprep.subr.bf16.mxu0 0
    %333 = vmatpush1.bf16.msra.mxu0 %v312
    %334 = vmatprep.subr.bf16.mxu0 0
    %335 = vmatpush1.bf16.msra.mxu0 %v313
    %336 = vmatprep.subr.bf16.mxu0 0
    %337 = vmatpush1.bf16.msra.mxu0 %v314
    %338 = vmatprep.subr.bf16.mxu0 0
    %339 = vmatpush1.bf16.msra.mxu0 %v315
    %340 = vmatprep.subr.bf16.mxu0 0
    %341 = vmatpush1.bf16.msra.mxu0 0
    %342 = vmatprep.subr.bf16.mxu0 0
    %343 = vmatpush1.bf16.msra.mxu0 0
    %344 = vmatprep.subr.bf16.mxu0 0
    %345 = vmatpush1.bf16.msra.mxu0 0
    %346 = vmatprep.subr.bf16.mxu0 0
    %347 = vmatpush1.bf16.msra.mxu0 0
    %348 = vmatprep.subr.bf16.mxu0 0
    %349 = vmatpush1.bf16.msra.mxu0 0
    %350 = vmatprep.subr.bf16.mxu0 0
    %351 = vmatpush1.bf16.msra.mxu0 0
    %352 = vmatprep.subr.bf16.mxu0 0
    %353 = vmatpush1.bf16.msra.mxu0 0
    %354 = vmatprep.subr.bf16.mxu0 0
    %355 = vmatpush1.bf16.msra.mxu0 0
    %356 = vmatprep.mubr.bf16.mxu0 0
    %357 = vmatmul.mubr.bf16.gmra.mrb[0].mxu0 %v252
    %v358 = vpop.f32.mrb[0].mxu0
    %v359 = vadd.f32 %v274, %v358
    %v360 = vpop.f32.mrb[0].mxu0
    %v361 = vpop.f32.mrb[0].mxu0
    %v362 = vpop.f32.mrb[0].mxu0
    %363 = vdwg.mxu0
    %364 = vst [vmem:[#allocation8] sm:$0xff] %v359
    // Predicated region
    $region42: #{mlp_forward.1} parent=1 // pred_check
      _
    $region43: #{mlp_forward.1} parent=1 // pred_check_branch
      %366 = sbr.rel (0) target = $region45
    $region44: #{mlp_forward.1} parent=1 // pred_region
      %s368 = ssub.s32 128, 128
      %369 = vsyncadd [#allocation4], %s368
      %s371 = sshll.u32 [#allocation8], 4
      %s372 = int_to_ptr.vmem [resolvable:$true] %s371
      %374 = dma.vmem_to_hbm [thread:$0]  %s372, 128, %s7, [#allocation4]
    $region45: #{mlp_forward.1} parent=1 // pred_fallthru
      _
    // Predicated region
    $region46: #{mlp_forward.1} parent=1 // pred_check
      _
    $region47: #{mlp_forward.1} parent=1 // pred_check_branch
      %376 = sbr.rel (0) target = $region49
    $region48: #{mlp_forward.1} parent=1 // pred_region
      %377 = dma.done [#allocation4], 128
    $region49: #{mlp_forward.1} parent=1 // pred_fallthru
      _
    %378 = vsyncpa [#allocation3], 1
    %379 = vsyncpa [#allocation6], 1
    %380 = vsyncpa [#allocation4], 1

</llo_original>
